<compile_context>
chip_gen: v7x
topology: tpu7x:2x2x1
jax: 0.10.0
libtpu: 0.0.40
codegen_flags: <defaults>
</compile_context>

<pallas_src>
import math
import jax
import jax.numpy as jnp
from jax.experimental import pallas as pl
from jax.experimental.pallas import tpu as pltpu


def _gelu_exact(x):
    # exact (erf-based) GELU, matching torch.nn.functional.gelu default
    return 0.5 * x * (1.0 + jax.lax.erf(x * (1.0 / math.sqrt(2.0))))


def mlp_kernel(x_ref, w1_ref, b1_ref, w2_ref, b2_ref, o_ref):
    # x_ref : (tm, intermediate)         -- native dtype (e.g. bf16/f32)
    # w1_ref: (intermediate, embed)      b1_ref: (1, embed)
    # w2_ref: (embed, intermediate)      b2_ref: (1, intermediate)
    # MXU accumulates in f32 directly from the native operand dtype; no full
    # f32 copies of the weight matrices are materialized.
    h = jnp.dot(x_ref[...], w1_ref[...], preferred_element_type=jnp.float32)
    h = h + b1_ref[...].astype(jnp.float32)

    # exact GELU (erf) in f32
    h = _gelu_exact(h)

    # c_proj: cast the (small) activation tile back to the weight dtype for the
    # second MXU pass, accumulate in f32, add bias in f32.
    y = jnp.dot(h.astype(w2_ref.dtype), w2_ref[...],
                preferred_element_type=jnp.float32)
    y = y + b2_ref[...].astype(jnp.float32)

    # dropout is identity at inference
    o_ref[...] = y.astype(o_ref.dtype)


def mlp_forward(x, w1, b1, w2, b2, *, tm=256):
    """x: (B, S, intermediate).
    w1: (embed, intermediate) [torch Linear layout], b1: (embed,),
    w2: (intermediate, embed), b2: (intermediate,).
    Weights/bias are used in their given dtype (pass bf16 params in production
    to halve resident VMEM and HBM->VMEM load time)."""
    B, S, inter = x.shape
    embed = w1.shape[0]
    M = B * S

    # Effective row tile: multiple of 8, no larger than needed for small M.
    tm_eff = min(int(tm), ((M + 7) // 8) * 8)
    tm_eff = max(8, (tm_eff // 8) * 8)

    # Pad the token dimension up to a multiple of the tile instead of asserting.
    M_pad = pl.cdiv(M, tm_eff) * tm_eff
    x2 = x.reshape(M, inter)
    if M_pad != M:
        x2 = jnp.pad(x2, ((0, M_pad - M), (0, 0)))

    # Pre-transpose weights so the kernel computes plain row-major matmuls.
    w1_t = w1.T                      # (intermediate, embed)
    w2_t = w2.T                      # (embed, intermediate)
    b1_2 = b1.reshape(1, embed)
    b2_2 = b2.reshape(1, inter)

    # Explicit scoped-VMEM budget: resident (double-buffered) weights + biases,
    # double-buffered x/out tiles, plus f32 intermediates, with headroom.
    wbytes = jnp.dtype(w1_t.dtype).itemsize
    xbytes = jnp.dtype(x.dtype).itemsize
    weight_bytes = 2 * (inter * embed * wbytes) * 2          # W1 + W2, 2x buffered
    bias_bytes = (embed + inter) * wbytes * 2
    act_bytes = 2 * (tm_eff * inter * xbytes) * 2            # x tile + out tile, 2x buffered
    scratch_bytes = tm_eff * (embed + inter) * 4             # f32 intermediates
    vmem_limit = int(1.5 * (weight_bytes + bias_bytes + act_bytes + scratch_bytes)) + (8 << 20)
    vmem_limit = max(16 << 20, min(vmem_limit, 64 << 20))    # safe on v5e/v6e/v7x

    out = pl.pallas_call(
        mlp_kernel,
        out_shape=jax.ShapeDtypeStruct((M_pad, inter), x.dtype),
        grid_spec=pltpu.PrefetchScalarGridSpec(
            num_scalar_prefetch=0,
            grid=(M_pad // tm_eff,),
            in_specs=[
                pl.BlockSpec((tm_eff, inter), lambda i: (i, 0)),   # x tile
                pl.BlockSpec((inter, embed), lambda i: (0, 0)),    # W1 (resident)
                pl.BlockSpec((1, embed), lambda i: (0, 0)),        # b1 (resident)
                pl.BlockSpec((embed, inter), lambda i: (0, 0)),    # W2 (resident)
                pl.BlockSpec((1, inter), lambda i: (0, 0)),        # b2 (resident)
            ],
            out_specs=pl.BlockSpec((tm_eff, inter), lambda i: (i, 0)),
        ),
        compiler_params=pltpu.CompilerParams(
            dimension_semantics=("parallel",),
            vmem_limit_bytes=vmem_limit,
        ),
    )(x2, w1_t, b1_2, w2_t, b2_2)

    if M_pad != M:
        out = out[:M]
    return out.reshape(B, S, inter)


def mlp_reference(x, w1, b1, w2, b2):
    h = jnp.einsum("bsi,ei->bse", x.astype(jnp.float32), w1.astype(jnp.float32)) + b1
    h = _gelu_exact(h)
    y = jnp.einsum("bse,ie->bsi", h, w2.astype(jnp.float32)) + b2
    return y.astype(x.dtype)


if __name__ == "__main__":
    # Small shapes consistent with the module's forward:
    #   batch=2, seq=8, intermediate_size=32, embed_dim (n_embd)=16
    B, S, INTER, EMBED = 2, 8, 32, 16

    key = jax.random.PRNGKey(0)
    kx, k1, k2, k3, k4 = jax.random.split(key, 5)

    x = jax.random.normal(kx, (B, S, INTER), dtype=jnp.float32)
    # Parameters in torch nn.Linear layout: weight (out_features, in_features)
    w1 = jax.random.normal(k1, (EMBED, INTER), dtype=jnp.float32) * 0.02   # c_fc.weight
    b1 = jax.random.normal(k2, (EMBED,), dtype=jnp.float32) * 0.02         # c_fc.bias
    w2 = jax.random.normal(k3, (INTER, EMBED), dtype=jnp.float32) * 0.02   # c_proj.weight
    b2 = jax.random.normal(k4, (INTER,), dtype=jnp.float32) * 0.02         # c_proj.bias

    out = mlp_forward(x, w1, b1, w2, b2)
    out = jax.block_until_ready(out)

    ref = mlp_reference(x, w1, b1, w2, b2)
    assert out.shape == (B, S, INTER)
    assert jnp.allclose(out, ref, atol=1e-5, rtol=1e-5), "mismatch vs reference"

    print("KERNEL_OK")
</pallas_src>

<mosaic_0001>
module attributes {stable_mosaic.version = 11 : i64} {
  func.func @mlp_kernel(%arg0: i32, %arg1: memref<16x32xf32, #tpu.memory_space<vmem>>, %arg2: memref<32x16xf32, #tpu.memory_space<vmem>>, %arg3: memref<1x16xf32, #tpu.memory_space<vmem>>, %arg4: memref<16x32xf32, #tpu.memory_space<vmem>>, %arg5: memref<1x32xf32, #tpu.memory_space<vmem>>, %arg6: memref<16x32xf32, #tpu.memory_space<vmem>>) attributes {dimension_semantics = [#tpu.dimension_semantics<parallel>], iteration_bounds = array<i64: 1>, scalar_prefetch = 0 : i64, scratch_operands = 0 : i64, tpu.core_type = #tpu.core_type<tc>, window_params = [{transform_indices = @transform_0, window_bounds = array<i64: 16, 32>}, {pipeline_mode = #tpu.pipeline_mode<synchronous>, transform_indices = @transform_1, window_bounds = array<i64: 32, 16>}, {pipeline_mode = #tpu.pipeline_mode<synchronous>, transform_indices = @transform_2, window_bounds = array<i64: 1, 16>}, {pipeline_mode = #tpu.pipeline_mode<synchronous>, transform_indices = @transform_3, window_bounds = array<i64: 16, 32>}, {pipeline_mode = #tpu.pipeline_mode<synchronous>, transform_indices = @transform_4, window_bounds = array<i64: 1, 32>}, {transform_indices = @transform_5, window_bounds = array<i64: 16, 32>}]} {
    %c0 = arith.constant 0 : index
    %c0_0 = arith.constant 0 : index
    %0 = vector.load %arg1[%c0, %c0_0] : memref<16x32xf32, #tpu.memory_space<vmem>>, vector<16x32xf32>
    %c0_1 = arith.constant 0 : index
    %c0_2 = arith.constant 0 : index
    %1 = vector.load %arg2[%c0_1, %c0_2] : memref<32x16xf32, #tpu.memory_space<vmem>>, vector<32x16xf32>
    %cst = arith.constant dense<0.000000e+00> : vector<16x16xf32>
    %2 = tpu.matmul %0, %1, %cst {dimension_numbers = #tpu.dot_dimension_numbers<[1], [0], [0], [1], [0, 0, 1, 1], [], []>} : vector<16x32xf32>, vector<32x16xf32>, vector<16x16xf32> -> vector<16x16xf32>
    %c0_3 = arith.constant 0 : index
    %c0_4 = arith.constant 0 : index
    %3 = vector.load %arg3[%c0_3, %c0_4] : memref<1x16xf32, #tpu.memory_space<vmem>>, vector<1x16xf32>
    %4 = vector.broadcast %3 : vector<1x16xf32> to vector<16x16xf32>
    %5 = arith.addf %2, %4 : vector<16x16xf32>
    %cst_5 = arith.constant 5.000000e-01 : f32
    %6 = vector.broadcast %cst_5 : f32 to vector<16x16xf32>
    %7 = arith.mulf %6, %5 : vector<16x16xf32>
    %cst_6 = arith.constant 0.707106769 : f32
    %8 = vector.broadcast %cst_6 : f32 to vector<16x16xf32>
    %9 = arith.mulf %5, %8 : vector<16x16xf32>
    %10 = math.erf %9 : vector<16x16xf32>
    %cst_7 = arith.constant 1.000000e+00 : f32
    %11 = vector.broadcast %cst_7 : f32 to vector<16x16xf32>
    %12 = arith.addf %11, %10 : vector<16x16xf32>
    %13 = arith.mulf %7, %12 : vector<16x16xf32>
    %c0_8 = arith.constant 0 : index
    %c0_9 = arith.constant 0 : index
    %14 = vector.load %arg4[%c0_8, %c0_9] : memref<16x32xf32, #tpu.memory_space<vmem>>, vector<16x32xf32>
    %cst_10 = arith.constant dense<0.000000e+00> : vector<16x32xf32>
    %15 = tpu.matmul %13, %14, %cst_10 {dimension_numbers = #tpu.dot_dimension_numbers<[1], [0], [0], [1], [0, 0, 1, 1], [], []>} : vector<16x16xf32>, vector<16x32xf32>, vector<16x32xf32> -> vector<16x32xf32>
    %c0_11 = arith.constant 0 : index
    %c0_12 = arith.constant 0 : index
    %16 = vector.load %arg5[%c0_11, %c0_12] : memref<1x32xf32, #tpu.memory_space<vmem>>, vector<1x32xf32>
    %17 = vector.broadcast %16 : vector<1x32xf32> to vector<16x32xf32>
    %18 = arith.addf %15, %17 : vector<16x32xf32>
    %c0_13 = arith.constant 0 : index
    %c0_14 = arith.constant 0 : index
    %19 = vector.load %arg6[%c0_13, %c0_14] : memref<16x32xf32, #tpu.memory_space<vmem>>, vector<16x32xf32>
    tpu.vector_store %arg6[%c0_13, %c0_14], %18 {strides = array<i32>} : memref<16x32xf32, #tpu.memory_space<vmem>>, vector<16x32xf32>,
    return
  }
  func.func @transform_0(%arg0: i32) -> (i32, i32) {
    %c0_i32 = arith.constant 0 : i32
    %c0_i32_0 = arith.constant 0 : i32
    return %arg0, %c0_i32 : i32, i32
  }
  func.func @transform_1(%arg0: i32) -> (i32, i32) {
    %c0_i32 = arith.constant 0 : i32
    %c0_i32_0 = arith.constant 0 : i32
    %c0_i32_1 = arith.constant 0 : i32
    return %c0_i32, %c0_i32_0 : i32, i32
  }
  func.func @transform_2(%arg0: i32) -> (i32, i32) {
    %c0_i32 = arith.constant 0 : i32
    %c0_i32_0 = arith.constant 0 : i32
    %c0_i32_1 = arith.constant 0 : i32
    return %c0_i32, %c0_i32_0 : i32, i32
  }
  func.func @transform_3(%arg0: i32) -> (i32, i32) {
    %c0_i32 = arith.constant 0 : i32
    %c0_i32_0 = arith.constant 0 : i32
    %c0_i32_1 = arith.constant 0 : i32
    return %c0_i32, %c0_i32_0 : i32, i32
  }
  func.func @transform_4(%arg0: i32) -> (i32, i32) {
    %c0_i32 = arith.constant 0 : i32
    %c0_i32_0 = arith.constant 0 : i32
    %c0_i32_1 = arith.constant 0 : i32
    return %c0_i32, %c0_i32_0 : i32, i32
  }
  func.func @transform_5(%arg0: i32) -> (i32, i32) {
    %c0_i32 = arith.constant 0 : i32
    %c0_i32_0 = arith.constant 0 : i32
    return %arg0, %c0_i32 : i32, i32
  }
}

</mosaic_0001>

<llo_original>
// kernel: tpu_custom_call.1
$region0: #{tpu_custom_call.1}
  #allocation0 [shape = 'u32[]', space=smem, size = 0x4, offset = 0x4, fixed_abs, tag = 'smem constant byte address 0x4 - core index']
  #allocation1 [shape = 'u32[144,128]{1,0:T(1,128)}', space=vmem, size = 0x12000, scoped, tag = 'internal scratch']
  %s0 = inlined_call_operand.vmem [shape: f32[16,32], index: 0, kind: input, shape index: {}]
  %s1 = inlined_call_operand.vmem [shape: f32[32,16], index: 1, kind: input, shape index: {}]
  %s2 = inlined_call_operand.vmem [shape: f32[1,16], index: 2, kind: input, shape index: {}]
  %s3 = inlined_call_operand.vmem [shape: f32[16,32], index: 3, kind: input, shape index: {}]
  %s4 = inlined_call_operand.vmem [shape: f32[1,32], index: 4, kind: input, shape index: {}]
  %s5 = inlined_call_operand.hbm [shape: f32[16,32], index: 5, kind: output, shape index: {}]
  %s6 = sld [smem:[#allocation0]]
  $region30: #{tpu_custom_call.1} parent=0
    _
  %s8 = ssub.s32 1, %s6
  %s9 = scalar_select 0, %s8, %s6
  $region1: #{tpu_custom_call.1} parent=0
    #allocation2 [shape = 'u8[8192]{0}', space=vmem, size = 0x2000, scoped, tag = 'output window, operand 0, single buffered']
    #allocation3 [shape = 's32[1]{0}', space=sflag, size = 0x4, scoped, tag = 'scoped memory for tpu_custom_call.1']
    %10 = vsyncpa [#allocation3], 0
    // Predicated region
    $region2: #{tpu_custom_call.1} parent=1 // pred_check
      _
    $region3: #{tpu_custom_call.1} parent=1 // pred_check_branch
      %12 = sbr.rel (0) target = $region5
    $region4: #{tpu_custom_call.1} parent=1 // pred_region
      _
    $region5: #{tpu_custom_call.1} parent=1 // pred_fallthru
      _
    // Predicated region
    $region6: #{tpu_custom_call.1} parent=1 // pred_check
      _
    $region7: #{tpu_custom_call.1} parent=1 // pred_check_branch
      %14 = sbr.rel (0) target = $region9
    $region8: #{tpu_custom_call.1} parent=1 // pred_region
      _
    $region9: #{tpu_custom_call.1} parent=1 // pred_fallthru
      _
    // Predicated region
    $region10: #{tpu_custom_call.1} parent=1 // pred_check
      _
    $region11: #{tpu_custom_call.1} parent=1 // pred_check_branch
      %16 = sbr.rel (0) target = $region13
    $region12: #{tpu_custom_call.1} parent=1 // pred_region
      _
    $region13: #{tpu_custom_call.1} parent=1 // pred_fallthru
      _
    // Predicated region
    $region14: #{tpu_custom_call.1} parent=1 // pred_check
      _
    $region15: #{tpu_custom_call.1} parent=1 // pred_check_branch
      %18 = sbr.rel (0) target = $region17
    $region16: #{tpu_custom_call.1} parent=1 // pred_region
      _
    $region17: #{tpu_custom_call.1} parent=1 // pred_fallthru
      _
    // Predicated region
    $region18: #{tpu_custom_call.1} parent=1 // pred_check
      _
    $region19: #{tpu_custom_call.1} parent=1 // pred_check_branch
      %20 = sbr.rel (0) target = $region21
    $region20: #{tpu_custom_call.1} parent=1 // pred_region
      _
    $region21: #{tpu_custom_call.1} parent=1 // pred_fallthru
      _
    %v21 = vld [vmem:[%s0] sm:$0xff]
    %v22 = vld [vmem:[%s0 + $0x8] sm:$0xff]
    %v23 = vld [vmem:[%s1] sm:$0xff]
    %v24 = vld [vmem:[%s1 + $0x8] sm:$0xff]
    %v25 = vld [vmem:[%s1 + $0x10] sm:$0xff]
    %v26 = vld [vmem:[%s1 + $0x18] sm:$0xff]
    %v27 = vld [vmem:[%s2] sm:$0x1]
    %v29 = vlaneseq
    %v30 = vshrl.u32 %v29, 7
    %v31 = vsub.s32 0, %v30
    %v32 = vrot.slane %v27, %v31
    %vm34 = vcmask 261120
    %v36 = vsel %vm34, %v21, 0
    %v39 = vsel %vm34, %v22, 0
    %41 = vmatprep.subr.mxu0 0.0
    %42 = vmatpush1.msra.mxu0 %v23
    %43 = vmatprep.subr.mxu0 0.0
    %44 = vmatpush1.msra.mxu0 %v24
    %45 = vmatprep.subr.mxu0 0.0
    %46 = vmatpush1.msra.mxu0 %v25
    %47 = vmatprep.subr.mxu0 0.0
    %48 = vmatpush1.msra.mxu0 %v26
    %49 = vmatprep.subr.mxu0 0.0
    %50 = vmatpush1.msra.mxu0 0.0
    %51 = vmatprep.subr.mxu0 0.0
    %52 = vmatpush1.msra.mxu0 0.0
    %53 = vmatprep.subr.mxu0 0.0
    %54 = vmatpush1.msra.mxu0 0.0
    %55 = vmatprep.subr.mxu0 0.0
    %56 = vmatpush1.msra.mxu0 0.0
    %57 = vmatprep.subr.mxu0 0.0
    %58 = vmatpush1.msra.mxu0 0.0
    %59 = vmatprep.subr.mxu0 0.0
    %60 = vmatpush1.msra.mxu0 0.0
    %61 = vmatprep.subr.mxu0 0.0
    %62 = vmatpush1.msra.mxu0 0.0
    %63 = vmatprep.subr.mxu0 0.0
    %64 = vmatpush1.msra.mxu0 0.0
    %65 = vmatprep.subr.mxu0 0.0
    %66 = vmatpush1.msra.mxu0 0.0
    %67 = vmatprep.subr.mxu0 0.0
    %68 = vmatpush1.msra.mxu0 0.0
    %69 = vmatprep.subr.mxu0 0.0
    %70 = vmatpush1.msra.mxu0 0.0
    %71 = vmatprep.subr.mxu0 0.0
    %72 = vmatpush1.msra.mxu0 0.0
    %73 = vmatprep.subr.mxu0 0.0
    %74 = vmatpush1.msra.mxu0 0.0
    %75 = vmatprep.subr.mxu0 0.0
    %76 = vmatpush1.msra.mxu0 0.0
    %77 = vmatprep.subr.mxu0 0.0
    %78 = vmatpush1.msra.mxu0 0.0
    %79 = vmatprep.subr.mxu0 0.0
    %80 = vmatpush1.msra.mxu0 0.0
    %81 = vmatprep.subr.mxu0 0.0
    %82 = vmatpush1.msra.mxu0 0.0
    %83 = vmatprep.subr.mxu0 0.0
    %84 = vmatpush1.msra.mxu0 0.0
    %85 = vmatprep.subr.mxu0 0.0
    %86 = vmatpush1.msra.mxu0 0.0
    %87 = vmatprep.subr.mxu0 0.0
    %88 = vmatpush1.msra.mxu0 0.0
    %89 = vmatprep.subr.mxu0 0.0
    %90 = vmatpush1.msra.mxu0 0.0
    %91 = vmatprep.subr.mxu0 0.0
    %92 = vmatpush1.msra.mxu0 0.0
    %93 = vmatprep.subr.mxu0 0.0
    %94 = vmatpush1.msra.mxu0 0.0
    %95 = vmatprep.subr.mxu0 0.0
    %96 = vmatpush1.msra.mxu0 0.0
    %97 = vmatprep.subr.mxu0 0.0
    %98 = vmatpush1.msra.mxu0 0.0
    %99 = vmatprep.subr.mxu0 0.0
    %100 = vmatpush1.msra.mxu0 0.0
    %101 = vmatprep.subr.mxu0 0.0
    %102 = vmatpush1.msra.mxu0 0.0
    %103 = vmatprep.subr.mxu0 0.0
    %104 = vmatpush1.msra.mxu0 0.0
    %105 = vmatprep.mubr.f32.mxu0 0.0
    %106 = vmatmul.mubr.f32.gmra.mrb[0].mxu0 %v36
    %v107 = vpop.f32.mrb[0].mxu0
    %v108 = vadd.f32 %v32, %v107
    %v109 = vpop.f32.mrb[0].mxu0
    %110 = vmatprep.mubr.f32.mxu0 0.0
    %111 = vmatmul.mubr.f32.gmra.mrb[0].mxu0 %v39
    %v112 = vpop.f32.mrb[0].mxu0
    %v113 = vadd.f32 %v32, %v112
    %v114 = vpop.f32.mrb[0].mxu0
    %115 = vdwg.mxu0
    %v116 = vmul.f32 %v108, 0.5
    %v117 = vmul.f32 %v113, 0.5
    %v118 = vmul.f32 %v108, 0.70710677
    %v119 = vmul.f32 %v113, 0.70710677
    %v120 = verf.f32.pop %v118
    %v121 = verf.f32.pop %v119
    %v122 = vadd.f32 %v120, 1.0
    %v123 = vadd.f32 %v121, 1.0
    %v124 = vmul.f32 %v116, %v122
    %v125 = vmul.f32 %v117, %v123
    %v126 = vld [vmem:[%s3] sm:$0xff]
    %v127 = vld [vmem:[%s3 + $0x8] sm:$0xff]
    %v128 = vld [vmem:[%s4] sm:$0x1]
    %v130 = vlaneseq
    %v131 = vshrl.u32 %v130, 7
    %v132 = vsub.s32 0, %v131
    %v133 = vrot.slane %v128, %v132
    %vm135 = vcmask 130048
    %v137 = vsel %vm135, %v124, 0
    %v140 = vsel %vm135, %v125, 0
    %142 = vmatprep.subr.mxu0 0.0
    %143 = vmatpush1.msra.mxu0 %v126
    %144 = vmatprep.subr.mxu0 0.0
    %145 = vmatpush1.msra.mxu0 %v127
    %146 = vmatprep.subr.mxu0 0.0
    %147 = vmatpush1.msra.mxu0 0.0
    %148 = vmatprep.subr.mxu0 0.0
    %149 = vmatpush1.msra.mxu0 0.0
    %150 = vmatprep.subr.mxu0 0.0
    %151 = vmatpush1.msra.mxu0 0.0
    %152 = vmatprep.subr.mxu0 0.0
    %153 = vmatpush1.msra.mxu0 0.0
    %154 = vmatprep.subr.mxu0 0.0
    %155 = vmatpush1.msra.mxu0 0.0
    %156 = vmatprep.subr.mxu0 0.0
    %157 = vmatpush1.msra.mxu0 0.0
    %158 = vmatprep.subr.mxu0 0.0
    %159 = vmatpush1.msra.mxu0 0.0
    %160 = vmatprep.subr.mxu0 0.0
    %161 = vmatpush1.msra.mxu0 0.0
    %162 = vmatprep.subr.mxu0 0.0
    %163 = vmatpush1.msra.mxu0 0.0
    %164 = vmatprep.subr.mxu0 0.0
    %165 = vmatpush1.msra.mxu0 0.0
    %166 = vmatprep.subr.mxu0 0.0
    %167 = vmatpush1.msra.mxu0 0.0
    %168 = vmatprep.subr.mxu0 0.0
    %169 = vmatpush1.msra.mxu0 0.0
    %170 = vmatprep.subr.mxu0 0.0
    %171 = vmatpush1.msra.mxu0 0.0
    %172 = vmatprep.subr.mxu0 0.0
    %173 = vmatpush1.msra.mxu0 0.0
    %174 = vmatprep.subr.mxu0 0.0
    %175 = vmatpush1.msra.mxu0 0.0
    %176 = vmatprep.subr.mxu0 0.0
    %177 = vmatpush1.msra.mxu0 0.0
    %178 = vmatprep.subr.mxu0 0.0
    %179 = vmatpush1.msra.mxu0 0.0
    %180 = vmatprep.subr.mxu0 0.0
    %181 = vmatpush1.msra.mxu0 0.0
    %182 = vmatprep.subr.mxu0 0.0
    %183 = vmatpush1.msra.mxu0 0.0
    %184 = vmatprep.subr.mxu0 0.0
    %185 = vmatpush1.msra.mxu0 0.0
    %186 = vmatprep.subr.mxu0 0.0
    %187 = vmatpush1.msra.mxu0 0.0
    %188 = vmatprep.subr.mxu0 0.0
    %189 = vmatpush1.msra.mxu0 0.0
    %190 = vmatprep.subr.mxu0 0.0
    %191 = vmatpush1.msra.mxu0 0.0
    %192 = vmatprep.subr.mxu0 0.0
    %193 = vmatpush1.msra.mxu0 0.0
    %194 = vmatprep.subr.mxu0 0.0
    %195 = vmatpush1.msra.mxu0 0.0
    %196 = vmatprep.subr.mxu0 0.0
    %197 = vmatpush1.msra.mxu0 0.0
    %198 = vmatprep.subr.mxu0 0.0
    %199 = vmatpush1.msra.mxu0 0.0
    %200 = vmatprep.subr.mxu0 0.0
    %201 = vmatpush1.msra.mxu0 0.0
    %202 = vmatprep.subr.mxu0 0.0
    %203 = vmatpush1.msra.mxu0 0.0
    %204 = vmatprep.subr.mxu0 0.0
    %205 = vmatpush1.msra.mxu0 0.0
    %206 = vmatprep.mubr.f32.mxu0 0.0
    %207 = vmatmul.mubr.f32.gmra.mrb[0].mxu0 %v137
    %v208 = vpop.f32.mrb[0].mxu0
    %v209 = vadd.f32 %v133, %v208
    %v210 = vpop.f32.mrb[0].mxu0
    %211 = vmatprep.mubr.f32.mxu0 0.0
    %212 = vmatmul.mubr.f32.gmra.mrb[0].mxu0 %v140
    %v213 = vpop.f32.mrb[0].mxu0
    %v214 = vadd.f32 %v133, %v213
    %v215 = vpop.f32.mrb[0].mxu0
    %216 = vdwg.mxu0
    %217 = vst.msk [vmem:[#allocation2] sm:$0xff] %vm34, %v209
    %218 = vst.msk [vmem:[#allocation2 + $0x8] sm:$0xff] %vm34, %v214
    // Predicated region
    $region22: #{tpu_custom_call.1} parent=1 // pred_check
      _
    $region23: #{tpu_custom_call.1} parent=1 // pred_check_branch
      %220 = sbr.rel (0) target = $region25
    $region24: #{tpu_custom_call.1} parent=1 // pred_region
      %s222 = ssub.s32 256, 256
      %223 = vsyncadd [#allocation3], %s222
      %s224 = sshll.u32 [#allocation2], 4
      %s225 = int_to_ptr.vmem [resolvable:$true] %s224
      %230 = dma.vmem_to_hbm [thread:$0]  %s225, 256, %s5, [#allocation3], 128, 128, 8
    $region25: #{tpu_custom_call.1} parent=1 // pred_fallthru
      _
    // Predicated region
    $region26: #{tpu_custom_call.1} parent=1 // pred_check
      _
    $region27: #{tpu_custom_call.1} parent=1 // pred_check_branch
      %232 = sbr.rel (0) target = $region29
    $region28: #{tpu_custom_call.1} parent=1 // pred_region
      %233 = dma.done [#allocation3], 256
    $region29: #{tpu_custom_call.1} parent=1 // pred_fallthru
      _
    %234 = vsyncpa [#allocation3], 1

</llo_original>
